<compile_context>
chip_gen: v7x
topology: tpu7x:2x2x1
jax: 0.10.0
libtpu: 0.0.40
codegen_flags: <defaults>
</compile_context>

<pallas_src>
import jax
import jax.numpy as jnp
from jax.experimental import pallas as pl
from jax.experimental.pallas import tpu as pltpu


# ----------------------------------------------------------------------------
# Zero-copy aliased identity (primary path)
# ----------------------------------------------------------------------------
def _alias_noop_kernel(x_ref, o_ref):
    # Output aliases the input HBM buffer (input_output_aliases={0: 0}); the
    # data is already in place, so just pin a read->write dependency on the
    # shared buffer.  No VMEM staging, no HBM read or write.
    del x_ref
    pltpu.touch(o_ref)


def if_forward(x, act_alpha=None):
    """Pallas implementation of IF.forward (identity).

    act_alpha exists only for parity with the PyTorch module's parameter and
    is unused in forward.  Under jit, donate `x` (donate_argnums) so XLA does
    not insert a defensive copy for the alias.
    """
    del act_alpha
    try:
        return pl.pallas_call(
            _alias_noop_kernel,
            out_shape=jax.ShapeDtypeStruct(x.shape, x.dtype),
            in_specs=[pl.BlockSpec(memory_space=pl.ANY)],
            out_specs=pl.BlockSpec(memory_space=pl.ANY),
            input_output_aliases={0: 0},
        )(x)
    except Exception:
        # Aliasing unavailable on this backend/runtime: produce a physical copy.
        return if_forward_copy(x)


# ----------------------------------------------------------------------------
# Physical-copy path (when a fresh output buffer is required)
# ----------------------------------------------------------------------------
def _copy_kernel(x_ref, o_ref):
    o_ref[...] = x_ref[...]


def _pick_lane(total):
    """Largest lane width (multiple of 128, capped at 1024) dividing `total`."""
    for cand in (1024, 512, 256, 128):
        if total % cand == 0:
            return cand
    return None


def _copy_budget():
    """(block_bytes, vmem_limit_bytes) tuned per TPU generation.

    v5e/v6e (128 MiB VMEM): 16 MiB blocks, 64 MiB scoped limit.
    v7x (64 MiB VMEM/TC) or unknown: 4 MiB blocks, 32 MiB limit (safe everywhere).
    """
    try:
        cap = int(getattr(pltpu.get_tpu_info(), "vmem_capacity_bytes", 64 << 20))
    except Exception:
        cap = 64 << 20
    if cap >= 100 * 1024 * 1024:
        return 16 * 1024 * 1024, 64 * 1024 * 1024
    return 4 * 1024 * 1024, 32 * 1024 * 1024


def _largest_aligned_divisor(rows, align, upper, min_steps):
    """Largest divisor d of rows with d % align == 0, d <= upper, rows//d >= min_steps."""
    best = None
    i = 1
    while i * i <= rows:
        if rows % i == 0:
            for d in (i, rows // i):
                if d % align == 0 and d <= upper and rows // d >= min_steps:
                    if best is None or d > best:
                        best = d
        i += 1
    return best


def if_forward_copy(x):
    """Identity that materializes a fresh output buffer via a tiled VMEM copy."""
    orig_shape = x.shape
    total = int(x.size)
    itemsize = x.dtype.itemsize
    block_bytes, vmem_limit = _copy_budget()

    lane = _pick_lane(total)
    if lane is None:
        # Element count not a multiple of 128: keep the original shape and
        # block only the leading axis (trailing dims stay at full extent,
        # which always satisfies the (8,128) layout rule).  VMEM use is now
        # bounded by the per-step block instead of the whole array.
        x_nd = x.reshape(1, total) if x.ndim < 2 else x
        ndim = x_nd.ndim
        lead = x_nd.shape[0]
        inner_bytes = max((total // max(lead, 1)) * itemsize, 1)
        tile_lead = max(1, min(lead, block_bytes // inner_bytes))
        while lead % tile_lead != 0:      # prefer an exact divisor (no ragged tail)
            tile_lead -= 1
        grid = (lead // tile_lead,)
        block_shape = (tile_lead,) + x_nd.shape[1:]
        idx_map = lambda i: (i,) + (0,) * (ndim - 1)
        out_nd = pl.pallas_call(
            _copy_kernel,
            out_shape=jax.ShapeDtypeStruct(x_nd.shape, x_nd.dtype),
            grid=grid,
            in_specs=[pl.BlockSpec(block_shape, idx_map)],
            out_specs=pl.BlockSpec(block_shape, idx_map),
            compiler_params=pltpu.CompilerParams(
                dimension_semantics=("parallel",),
                vmem_limit_bytes=vmem_limit,
            ),
        )(x_nd)
        return out_nd.reshape(orig_shape)

    # Lane-dense layout: contiguous flatten to (rows, lane) is a bitcast.
    rows = total // lane
    x2 = x.reshape(rows, lane)

    # Sublane alignment for packed dtypes (f32: 8, bf16: 16, int8/fp8: 32).
    sub_align = {4: 8, 2: 16, 1: 32}.get(itemsize, 8)

    # Biggest tile that fits the per-generation block budget...
    max_tile_rows = max(
        sub_align, (block_bytes // (lane * itemsize)) // sub_align * sub_align
    )
    # ...but force >=8 grid steps on large arrays so v7x shards the copy
    # across its 2 TensorCores.
    min_steps = 8 if total * itemsize >= 8 * block_bytes else 1

    if rows <= sub_align:
        tile_rows = rows                       # full extent -> always layout-legal
    else:
        tile_rows = _largest_aligned_divisor(rows, sub_align, max_tile_rows, min_steps)
        if tile_rows is None:
            # No exact aligned divisor: cdiv with a (correct) masked tail.
            tile_rows = min(max_tile_rows, max(rows // min_steps, sub_align))
            tile_rows = max(sub_align, (tile_rows // sub_align) * sub_align)

    grid = (pl.cdiv(rows, tile_rows),)

    out2 = pl.pallas_call(
        _copy_kernel,
        out_shape=jax.ShapeDtypeStruct((rows, lane), x2.dtype),
        grid=grid,
        in_specs=[pl.BlockSpec((tile_rows, lane), lambda i: (i, 0))],
        out_specs=pl.BlockSpec((tile_rows, lane), lambda i: (i, 0)),
        compiler_params=pltpu.CompilerParams(
            dimension_semantics=("parallel",),   # shards steps across TCs on v7x
            vmem_limit_bytes=vmem_limit,
        ),
    )(x2)
    return out2.reshape(orig_shape)


if __name__ == "__main__":
    key = jax.random.PRNGKey(0)
    x = jax.random.normal(key, (2, 4, 16, 16), dtype=jnp.float32)

    # Parity with torch.nn.Parameter(torch.tensor(1.0)); unused in forward.
    act_alpha = jnp.array(1.0, dtype=jnp.float32)

    # Primary zero-copy aliased path.
    y = if_forward(x, act_alpha)
    jax.block_until_ready(y)
    assert y.shape == x.shape and y.dtype == x.dtype
    assert bool(jnp.all(y == x))

    # Also exercise the physical-copy path once (used when aliasing/donation
    # is not possible and a fresh buffer is required).
    y2 = if_forward_copy(x)
    jax.block_until_ready(y2)
    assert y2.shape == x.shape and y2.dtype == x.dtype
    assert bool(jnp.all(y2 == x))

    print("KERNEL_OK")
</pallas_src>

<mosaic_0001>
module attributes {stable_mosaic.version = 11 : i64} {
  func.func @_alias_noop_kernel(%arg0: memref<2x4x16x16xf32, #tpu.memory_space<any>>, %arg1: memref<2x4x16x16xf32, #tpu.memory_space<any>>) attributes {dimension_semantics = [], scalar_prefetch = 0 : i64, scratch_operands = 0 : i64, tpu.core_type = #tpu.core_type<tc>} {
    return
  }
}

module attributes {stable_mosaic.version = 11 : i64} {
  func.func @_copy_kernel(%arg0: i32, %arg1: memref<2x1024xf32, #tpu.memory_space<vmem>>, %arg2: memref<2x1024xf32, #tpu.memory_space<vmem>>) attributes {dimension_semantics = [#tpu.dimension_semantics<parallel>], iteration_bounds = array<i64: 1>, scalar_prefetch = 0 : i64, scratch_operands = 0 : i64, tpu.core_type = #tpu.core_type<tc>, window_params = [{transform_indices = @transform_0, window_bounds = array<i64: 2, 1024>}, {transform_indices = @transform_1, window_bounds = array<i64: 2, 1024>}]} {
    %c0 = arith.constant 0 : index
    %c0_0 = arith.constant 0 : index
    %0 = vector.load %arg1[%c0, %c0_0] : memref<2x1024xf32, #tpu.memory_space<vmem>>, vector<2x1024xf32>
    %c0_1 = arith.constant 0 : index
    %c0_2 = arith.constant 0 : index
    %1 = vector.load %arg2[%c0_1, %c0_2] : memref<2x1024xf32, #tpu.memory_space<vmem>>, vector<2x1024xf32>
    tpu.vector_store %arg2[%c0_1, %c0_2], %0 {strides = array<i32>} : memref<2x1024xf32, #tpu.memory_space<vmem>>, vector<2x1024xf32>,
    return
  }
  func.func @transform_0(%arg0: i32) -> (i32, i32) {
    %c0_i32 = arith.constant 0 : i32
    %c0_i32_0 = arith.constant 0 : i32
    return %arg0, %c0_i32 : i32, i32
  }
  func.func @transform_1(%arg0: i32) -> (i32, i32) {
    %c0_i32 = arith.constant 0 : i32
    %c0_i32_0 = arith.constant 0 : i32
    return %arg0, %c0_i32 : i32, i32
  }
}

</mosaic_0001>

<llo_original>
// kernel: tpu_custom_call.1
$region0: #{tpu_custom_call.1}
  #allocation0 [shape = 'u32[]', space=smem, size = 0x4, offset = 0x4, fixed_abs, tag = 'smem constant byte address 0x4 - core index']
  #allocation1 [shape = 'u32[144,128]{1,0:T(1,128)}', space=vmem, size = 0x12000, scoped, tag = 'internal scratch']
  %s0 = inlined_call_operand.hbm [shape: f32[2,4,16,16], index: 0, kind: input, shape index: {}, may-alias: {0,1}]
  %s1 = inlined_call_operand.hbm [shape: f32[2,4,16,16], index: 1, kind: output, shape index: {}, may-alias: {0,1}]
  %s2 = sld [smem:[#allocation0]]
  $region2: #{tpu_custom_call.1} parent=0
    _
  %s4 = ssub.s32 1, %s2
  %s5 = scalar_select 0, %s4, %s2

// kernel: tpu_custom_call.1
$region0: #{tpu_custom_call.1}
  #allocation0 [shape = 'u32[]', space=smem, size = 0x4, offset = 0x4, fixed_abs, tag = 'smem constant byte address 0x4 - core index']
  #allocation1 [shape = 'u32[144,128]{1,0:T(1,128)}', space=vmem, size = 0x12000, scoped, tag = 'internal scratch']
  %s0 = inlined_call_operand.hbm [shape: f32[2,1024], index: 0, kind: input, shape index: {}]
  %s1 = inlined_call_operand.hbm [shape: f32[2,1024], index: 1, kind: output, shape index: {}]
  %s2 = sld [smem:[#allocation0]]
  $region18: #{tpu_custom_call.1} parent=0
    _
  %s4 = ssub.s32 1, %s2
  %s5 = scalar_select 0, %s4, %s2
  $region1: #{tpu_custom_call.1} parent=0
    #allocation2 [shape = 'u8[8192]{0}', space=vmem, size = 0x2000, scoped, tag = 'input window, operand 0, single buffered']
    #allocation3 [shape = 's32[1]{0}', space=sflag, size = 0x4, scoped, tag = 'scoped memory for tpu_custom_call.1']
    #allocation4 [shape = 's32[1]{0}', space=sflag, size = 0x4, scoped, tag = 'scoped memory for tpu_custom_call.1']
    #allocation5 [shape = 'u8[8192]{0}', space=vmem, size = 0x2000, scoped, tag = 'output window, operand 0, single buffered']
    %6 = vsyncpa [#allocation3], 0
    %7 = vsyncpa [#allocation4], 0
    // Predicated region
    $region2: #{tpu_custom_call.1} parent=1 // pred_check
      _
    $region3: #{tpu_custom_call.1} parent=1 // pred_check_branch
      %9 = sbr.rel (0) target = $region5
    $region4: #{tpu_custom_call.1} parent=1 // pred_region
      %s11 = ssub.s32 256, 256
      %12 = vsyncadd [#allocation3], %s11
      %s14 = sshll.u32 [#allocation2], 4
      %s15 = int_to_ptr.vmem [resolvable:$true] %s14
      %17 = dma.hbm_to_vmem [thread:$0]  %s0, 256, %s15, [#allocation3]
    $region5: #{tpu_custom_call.1} parent=1 // pred_fallthru
      _
    // Predicated region
    $region6: #{tpu_custom_call.1} parent=1 // pred_check
      _
    $region7: #{tpu_custom_call.1} parent=1 // pred_check_branch
      %19 = sbr.rel (0) target = $region9
    $region8: #{tpu_custom_call.1} parent=1 // pred_region
      %20 = dma.done [#allocation3], 256
    $region9: #{tpu_custom_call.1} parent=1 // pred_fallthru
      _
    %v21 = vld [vmem:[#allocation2] sm:$0xff]
    %v22 = vld [vmem:[#allocation2 + $0x8] sm:$0xff]
    %23 = vst [vmem:[#allocation5] sm:$0xff] %v21
    %24 = vst [vmem:[#allocation5 + $0x8] sm:$0xff] %v22
    // Predicated region
    $region10: #{tpu_custom_call.1} parent=1 // pred_check
      _
    $region11: #{tpu_custom_call.1} parent=1 // pred_check_branch
      %26 = sbr.rel (0) target = $region13
    $region12: #{tpu_custom_call.1} parent=1 // pred_region
      %s28 = ssub.s32 256, 256
      %29 = vsyncadd [#allocation4], %s28
      %s31 = sshll.u32 [#allocation5], 4
      %s32 = int_to_ptr.vmem [resolvable:$true] %s31
      %34 = dma.vmem_to_hbm [thread:$0]  %s32, 256, %s1, [#allocation4]
    $region13: #{tpu_custom_call.1} parent=1 // pred_fallthru
      _
    // Predicated region
    $region14: #{tpu_custom_call.1} parent=1 // pred_check
      _
    $region15: #{tpu_custom_call.1} parent=1 // pred_check_branch
      %36 = sbr.rel (0) target = $region17
    $region16: #{tpu_custom_call.1} parent=1 // pred_region
      %37 = dma.done [#allocation4], 256
    $region17: #{tpu_custom_call.1} parent=1 // pred_fallthru
      _
    %38 = vsyncpa [#allocation3], 1
    %39 = vsyncpa [#allocation4], 1

</llo_original>
